<compile_context>
chip_gen: v7x
topology: tpu7x:2x2x1
jax: 0.10.0
libtpu: 0.0.40
codegen_flags: <defaults>
</compile_context>

<pallas_src>
import functools

import jax
import jax.numpy as jnp
from jax import lax
from jax.experimental import pallas as pl
from jax.experimental.pallas import tpu as pltpu


def regressor_head_kernel(x_ref,
                          w0_ref, b0_ref,
                          w1_ref, b1_ref,
                          wo_ref, bo_ref,
                          out_ref,
                          *, n_chunks, chunk, n_out):
    """Fused MLP on one batch tile: relu(x@W0+b0) -> relu(.@W1+b1) -> .@Wo+bo.

    The tile is processed in `n_chunks` sub-chunks of `chunk` rows so MXU work of
    one chunk hides the VPU epilogue (bias+ReLU+bf16 cast) of the previous one and
    f32 intermediates stay small in VMEM.  Only the first `n_out` columns of the
    (lane-padded) output matmul are stored.
    """
    # Tiny, grid-resident weights / biases: load once per grid step.
    w0 = w0_ref[...]          # (D_in, H0p) bf16
    b0 = b0_ref[...]          # (1, H0p)    f32
    w1 = w1_ref[...]          # (H0p, H1p)  bf16
    b1 = b1_ref[...]          # (1, H1p)    f32
    wo = wo_ref[...]          # (H1p, Cp)   bf16
    bo = bo_ref[...]          # (1, Cp)     f32

    def body(j, carry):
        r = pl.multiple_of(j * chunk, chunk)
        # Cast the f32 activations to bf16 in-kernel (no wrapper-side cast pass).
        x = x_ref[pl.ds(r, chunk), :].astype(jnp.bfloat16)          # (chunk, D_in)

        # layer_0: (dropout identity) -> linear -> relu
        h0 = jnp.dot(x, w0, preferred_element_type=jnp.float32)
        h0 = jnp.maximum(h0 + b0, 0.0)                               # f32 (chunk, H0p)

        # layer_1: (dropout identity) -> linear -> relu
        h1 = jnp.dot(h0.astype(jnp.bfloat16), w1,
                     preferred_element_type=jnp.float32)
        h1 = jnp.maximum(h1 + b1, 0.0)                               # f32 (chunk, H1p)

        # output linear (no activation); store only the real n_classes columns.
        y = jnp.dot(h1.astype(jnp.bfloat16), wo,
                    preferred_element_type=jnp.float32) + bo         # f32 (chunk, Cp)
        out_ref[pl.ds(r, chunk), :] = y[:, :n_out].astype(out_ref.dtype)
        return carry

    lax.fori_loop(0, n_chunks, body, None, unroll=True)


def _round_up(v, m):
    return ((v + m - 1) // m) * m


def _pad2(a, shape):
    """Zero-pad a 2-D array up to `shape` (trailing pad only)."""
    pr = shape[0] - a.shape[0]
    pc = shape[1] - a.shape[1]
    if pr == 0 and pc == 0:
        return a
    return jnp.pad(a, ((0, pr), (0, pc)))


def regressor_head(x, params, tile_b=8192, sub_chunk=512):
    """x: (B, input_size) float32.  params: dict of f32 weights/biases.

    Weights stored as [in_features, out_features] (transposed vs nn.Linear),
    biases as [1, out_features].  Returns (B, n_classes) float32.
    """
    w0, b0 = params["w0"], params["b0"]
    w1, b1 = params["w1"], params["b1"]
    wo, bo = params["wo"], params["bo"]

    B, D_in = x.shape
    H0, H1, C = w0.shape[1], w1.shape[1], wo.shape[1]

    # Lane-dense (multiple-of-128) padded widths for the hidden / output matmuls.
    # Zero pad columns/rows are exact through matmul + bias + ReLU; the kernel
    # only stores the first C columns of the final result.
    H0p = _round_up(H0, 128)
    H1p = _round_up(H1, 128)
    Cp = _round_up(C, 128)

    # Weights to bf16 once (MXU-native); biases stay f32 for f32 accumulation.
    w0p = _pad2(w0, (D_in, H0p)).astype(jnp.bfloat16)
    b0p = _pad2(b0, (1, H0p)).astype(jnp.float32)
    w1p = _pad2(w1, (H0p, H1p)).astype(jnp.bfloat16)
    b1p = _pad2(b1, (1, H1p)).astype(jnp.float32)
    wop = _pad2(wo, (H1p, Cp)).astype(jnp.bfloat16)
    bop = _pad2(bo, (1, Cp)).astype(jnp.float32)

    # Batch tiling.  No padding of x: the ragged last block (if any) is clipped by
    # Pallas (reads padded, out-of-bounds writes masked) and rows are independent.
    tb = min(tile_b, _round_up(B, 8))
    # v7x megacore: make sure the grid has >=2 steps when there is enough work,
    # so dimension_semantics=("parallel",) actually feeds both TensorCores.
    if B > 2048 and pl.cdiv(B, tb) < 2:
        tb = _round_up(pl.cdiv(B, 2), 8)
    chunk = min(sub_chunk, tb)
    tb = _round_up(tb, chunk)          # whole in-kernel sub-chunks per tile
    n_chunks = tb // chunk
    grid = (pl.cdiv(B, tb),)

    const2 = lambda i: (0, 0)   # weights/biases: same block every step -> stay resident

    kernel = functools.partial(regressor_head_kernel,
                               n_chunks=n_chunks, chunk=chunk, n_out=C)

    y = pl.pallas_call(
        kernel,
        out_shape=jax.ShapeDtypeStruct((B, C), jnp.float32),
        grid_spec=pltpu.PrefetchScalarGridSpec(
            num_scalar_prefetch=0,
            grid=grid,
            in_specs=[
                pl.BlockSpec((tb, D_in), lambda i: (i, 0)),   # x streams by batch tile (f32)
                pl.BlockSpec((D_in, H0p), const2),
                pl.BlockSpec((1, H0p), const2),
                pl.BlockSpec((H0p, H1p), const2),
                pl.BlockSpec((1, H1p), const2),
                pl.BlockSpec((H1p, Cp), const2),
                pl.BlockSpec((1, Cp), const2),
            ],
            # Narrow, un-padded output: block last dim == full array dim (C), so the
            # (8,128) rule does not apply; writeback is C*4 bytes/row instead of 512.
            out_specs=pl.BlockSpec((tb, C), lambda i: (i, 0)),
        ),
        compiler_params=pltpu.CompilerParams(
            dimension_semantics=("parallel",),          # v7x: shard batch tiles over 2 TCs
            vmem_limit_bytes=48 * 1024 * 1024,          # safe on v7x's 64 MiB VMEM
        ),
    )(x, w0p, b0p, w1p, b1p, wop, bop)

    return y


def init_params(key, input_size, reg_layers, n_classes):
    """Deterministic parameter init (PyTorch-style uniform fan-in bound)."""
    params = {}
    dims = [input_size] + list(reg_layers)
    keys = jax.random.split(key, 2 * (len(reg_layers) + 1))
    ki = 0
    for i in range(len(reg_layers)):
        fan_in, fan_out = dims[i], dims[i + 1]
        bound = 1.0 / jnp.sqrt(fan_in)
        params[f"w{i}"] = jax.random.uniform(
            keys[ki], (fan_in, fan_out), minval=-bound, maxval=bound,
            dtype=jnp.float32)
        params[f"b{i}"] = jax.random.uniform(
            keys[ki + 1], (1, fan_out), minval=-bound, maxval=bound,
            dtype=jnp.float32)
        ki += 2
    fan_in = reg_layers[-1]
    bound = 1.0 / jnp.sqrt(fan_in)
    params["wo"] = jax.random.uniform(
        keys[ki], (fan_in, n_classes), minval=-bound, maxval=bound,
        dtype=jnp.float32)
    params["bo"] = jax.random.uniform(
        keys[ki + 1], (1, n_classes), minval=-bound, maxval=bound,
        dtype=jnp.float32)
    return params


def regressor_head_ref(x, params):
    """Pure-JAX f32 reference (eval-mode dropout = identity)."""
    h = jnp.maximum(x @ params["w0"] + params["b0"], 0.0)
    h = jnp.maximum(h @ params["w1"] + params["b1"], 0.0)
    return h @ params["wo"] + params["bo"]


if __name__ == "__main__":
    # Small config: input_size=32, reg_layers=[64, 32], n_classes=4, batch=8.
    # NOTE: this config is launch-overhead bound; tune tile_b at realistic
    # batch sizes (tens of thousands of rows) for real benchmarking.
    input_size = 32
    reg_layers = (64, 32)
    n_classes = 4
    batch = 8

    key = jax.random.PRNGKey(0)
    kx, kp = jax.random.split(key)
    x = jax.random.normal(kx, (batch, input_size), dtype=jnp.float32)
    params = init_params(kp, input_size, reg_layers, n_classes)

    y = regressor_head(x, params)
    y = jax.block_until_ready(y)

    y_ref = regressor_head_ref(x, params)
    assert y.shape == (batch, n_classes)
    # bf16 matmul operands with f32 accumulation -> ~1e-3..1e-2 rel. error.
    assert jnp.allclose(y, y_ref, atol=2e-2, rtol=2e-2), (
        float(jnp.max(jnp.abs(y - y_ref))))

    print("KERNEL_OK")
</pallas_src>

<mosaic_0001>
module attributes {stable_mosaic.version = 11 : i64} {
  func.func @regressor_head_kernel(%arg0: i32, %arg1: memref<8x32xf32, #tpu.memory_space<vmem>>, %arg2: memref<32x128xbf16, #tpu.memory_space<vmem>>, %arg3: memref<1x128xf32, #tpu.memory_space<vmem>>, %arg4: memref<128x128xbf16, #tpu.memory_space<vmem>>, %arg5: memref<1x128xf32, #tpu.memory_space<vmem>>, %arg6: memref<128x128xbf16, #tpu.memory_space<vmem>>, %arg7: memref<1x128xf32, #tpu.memory_space<vmem>>, %arg8: memref<8x4xf32, #tpu.memory_space<vmem>>) attributes {dimension_semantics = [#tpu.dimension_semantics<parallel>], iteration_bounds = array<i64: 1>, scalar_prefetch = 0 : i64, scratch_operands = 0 : i64, tpu.core_type = #tpu.core_type<tc>, window_params = [{transform_indices = @transform_0, window_bounds = array<i64: 8, 32>}, {pipeline_mode = #tpu.pipeline_mode<synchronous>, transform_indices = @transform_1, window_bounds = array<i64: 32, 128>}, {pipeline_mode = #tpu.pipeline_mode<synchronous>, transform_indices = @transform_2, window_bounds = array<i64: 1, 128>}, {pipeline_mode = #tpu.pipeline_mode<synchronous>, transform_indices = @transform_3, window_bounds = array<i64: 128, 128>}, {pipeline_mode = #tpu.pipeline_mode<synchronous>, transform_indices = @transform_4, window_bounds = array<i64: 1, 128>}, {pipeline_mode = #tpu.pipeline_mode<synchronous>, transform_indices = @transform_5, window_bounds = array<i64: 128, 128>}, {pipeline_mode = #tpu.pipeline_mode<synchronous>, transform_indices = @transform_6, window_bounds = array<i64: 1, 128>}, {transform_indices = @transform_7, window_bounds = array<i64: 8, 4>}]} {
    %c0 = arith.constant 0 : index
    %c0_0 = arith.constant 0 : index
    %0 = vector.load %arg2[%c0, %c0_0] : memref<32x128xbf16, #tpu.memory_space<vmem>>, vector<32x128xbf16>
    %c0_1 = arith.constant 0 : index
    %c0_2 = arith.constant 0 : index
    %1 = vector.load %arg3[%c0_1, %c0_2] : memref<1x128xf32, #tpu.memory_space<vmem>>, vector<1x128xf32>
    %c0_3 = arith.constant 0 : index
    %c0_4 = arith.constant 0 : index
    %2 = vector.load %arg4[%c0_3, %c0_4] : memref<128x128xbf16, #tpu.memory_space<vmem>>, vector<128x128xbf16>
    %c0_5 = arith.constant 0 : index
    %c0_6 = arith.constant 0 : index
    %3 = vector.load %arg5[%c0_5, %c0_6] : memref<1x128xf32, #tpu.memory_space<vmem>>, vector<1x128xf32>
    %c0_7 = arith.constant 0 : index
    %c0_8 = arith.constant 0 : index
    %4 = vector.load %arg6[%c0_7, %c0_8] : memref<128x128xbf16, #tpu.memory_space<vmem>>, vector<128x128xbf16>
    %c0_9 = arith.constant 0 : index
    %c0_10 = arith.constant 0 : index
    %5 = vector.load %arg7[%c0_9, %c0_10] : memref<1x128xf32, #tpu.memory_space<vmem>>, vector<1x128xf32>
    %c0_i32 = arith.constant 0 : i32
    %c8_i32 = arith.constant 8 : i32
    %6 = arith.muli %c0_i32, %c8_i32 : i32
    %7 = tpu.assume_multiple %6, 8 : i32
    %8 = arith.index_cast %7 : i32 to index
    %c0_11 = arith.constant 0 : index
    %9 = vector.load %arg1[%8, %c0_11] : memref<8x32xf32, #tpu.memory_space<vmem>>, vector<8x32xf32>
    %10 = arith.truncf %9 : vector<8x32xf32> to vector<8x32xbf16>
    %cst = arith.constant dense<0.000000e+00> : vector<8x128xf32>
    %11 = tpu.matmul %10, %0, %cst {dimension_numbers = #tpu.dot_dimension_numbers<[1], [0], [0], [1], [0, 0, 1, 1], [], []>} : vector<8x32xbf16>, vector<32x128xbf16>, vector<8x128xf32> -> vector<8x128xf32>
    %12 = vector.broadcast %1 : vector<1x128xf32> to vector<8x128xf32>
    %13 = arith.addf %11, %12 : vector<8x128xf32>
    %cst_12 = arith.constant 0.000000e+00 : f32
    %14 = vector.broadcast %cst_12 : f32 to vector<8x128xf32>
    %15 = arith.maximumf %13, %14 : vector<8x128xf32>
    %16 = arith.truncf %15 : vector<8x128xf32> to vector<8x128xbf16>
    %cst_13 = arith.constant dense<0.000000e+00> : vector<8x128xf32>
    %17 = tpu.matmul %16, %2, %cst_13 {dimension_numbers = #tpu.dot_dimension_numbers<[1], [0], [0], [1], [0, 0, 1, 1], [], []>} : vector<8x128xbf16>, vector<128x128xbf16>, vector<8x128xf32> -> vector<8x128xf32>
    %18 = vector.broadcast %3 : vector<1x128xf32> to vector<8x128xf32>
    %19 = arith.addf %17, %18 : vector<8x128xf32>
    %cst_14 = arith.constant 0.000000e+00 : f32
    %20 = vector.broadcast %cst_14 : f32 to vector<8x128xf32>
    %21 = arith.maximumf %19, %20 : vector<8x128xf32>
    %22 = arith.truncf %21 : vector<8x128xf32> to vector<8x128xbf16>
    %cst_15 = arith.constant dense<0.000000e+00> : vector<8x128xf32>
    %23 = tpu.matmul %22, %4, %cst_15 {dimension_numbers = #tpu.dot_dimension_numbers<[1], [0], [0], [1], [0, 0, 1, 1], [], []>} : vector<8x128xbf16>, vector<128x128xbf16>, vector<8x128xf32> -> vector<8x128xf32>
    %24 = vector.broadcast %5 : vector<1x128xf32> to vector<8x128xf32>
    %25 = arith.addf %23, %24 : vector<8x128xf32>
    %26 = vector.extract_strided_slice %25 {offsets = [0, 0], sizes = [8, 4], strides = [1, 1]} : vector<8x128xf32> to vector<8x4xf32>
    %27 = arith.index_cast %7 : i32 to index
    %c0_16 = arith.constant 0 : index
    %28 = vector.load %arg8[%27, %c0_16] : memref<8x4xf32, #tpu.memory_space<vmem>>, vector<8x4xf32>
    tpu.vector_store %arg8[%27, %c0_16], %26 {strides = array<i32>} : memref<8x4xf32, #tpu.memory_space<vmem>>, vector<8x4xf32>,
    %c1_i32 = arith.constant 1 : i32
    return
  }
  func.func @transform_0(%arg0: i32) -> (i32, i32) {
    %c0_i32 = arith.constant 0 : i32
    %c0_i32_0 = arith.constant 0 : i32
    return %arg0, %c0_i32 : i32, i32
  }
  func.func @transform_1(%arg0: i32) -> (i32, i32) {
    %c0_i32 = arith.constant 0 : i32
    %c0_i32_0 = arith.constant 0 : i32
    %c0_i32_1 = arith.constant 0 : i32
    return %c0_i32, %c0_i32_0 : i32, i32
  }
  func.func @transform_2(%arg0: i32) -> (i32, i32) {
    %c0_i32 = arith.constant 0 : i32
    %c0_i32_0 = arith.constant 0 : i32
    %c0_i32_1 = arith.constant 0 : i32
    return %c0_i32, %c0_i32_0 : i32, i32
  }
  func.func @transform_3(%arg0: i32) -> (i32, i32) {
    %c0_i32 = arith.constant 0 : i32
    %c0_i32_0 = arith.constant 0 : i32
    %c0_i32_1 = arith.constant 0 : i32
    return %c0_i32, %c0_i32_0 : i32, i32
  }
  func.func @transform_4(%arg0: i32) -> (i32, i32) {
    %c0_i32 = arith.constant 0 : i32
    %c0_i32_0 = arith.constant 0 : i32
    %c0_i32_1 = arith.constant 0 : i32
    return %c0_i32, %c0_i32_0 : i32, i32
  }
  func.func @transform_5(%arg0: i32) -> (i32, i32) {
    %c0_i32 = arith.constant 0 : i32
    %c0_i32_0 = arith.constant 0 : i32
    %c0_i32_1 = arith.constant 0 : i32
    return %c0_i32, %c0_i32_0 : i32, i32
  }
  func.func @transform_6(%arg0: i32) -> (i32, i32) {
    %c0_i32 = arith.constant 0 : i32
    %c0_i32_0 = arith.constant 0 : i32
    %c0_i32_1 = arith.constant 0 : i32
    return %c0_i32, %c0_i32_0 : i32, i32
  }
  func.func @transform_7(%arg0: i32) -> (i32, i32) {
    %c0_i32 = arith.constant 0 : i32
    %c0_i32_0 = arith.constant 0 : i32
    return %arg0, %c0_i32 : i32, i32
  }
}

</mosaic_0001>

<llo_original>
// kernel: tpu_custom_call.1
$region0: #{tpu_custom_call.1}
  #allocation0 [shape = 'u32[]', space=smem, size = 0x4, offset = 0x4, fixed_abs, tag = 'smem constant byte address 0x4 - core index']
  #allocation1 [shape = 'u32[144,128]{1,0:T(1,128)}', space=vmem, size = 0x12000, scoped, tag = 'internal scratch']
  %s0 = inlined_call_operand.hbm [shape: f32[8,32], index: 0, kind: input, shape index: {}]
  %s1 = inlined_call_operand.hbm [shape: bf16[32,128], index: 1, kind: input, shape index: {}]
  %s2 = inlined_call_operand.vmem [shape: f32[1,128], index: 2, kind: input, shape index: {}]
  %s3 = inlined_call_operand.hbm [shape: bf16[128,128], index: 3, kind: input, shape index: {}]
  %s4 = inlined_call_operand.vmem [shape: f32[1,128], index: 4, kind: input, shape index: {}]
  %s5 = inlined_call_operand.hbm [shape: bf16[128,128], index: 5, kind: input, shape index: {}]
  %s6 = inlined_call_operand.vmem [shape: f32[1,128], index: 6, kind: input, shape index: {}]
  %s7 = inlined_call_operand.vmem [shape: f32[8,4], index: 7, kind: output, shape index: {}]
  %s8 = sld [smem:[#allocation0]]
  $region54: #{tpu_custom_call.1} parent=0
    _
  %s10 = ssub.s32 1, %s8
  %s11 = scalar_select 0, %s10, %s8
  $region1: #{tpu_custom_call.1} parent=0
    #allocation2 [shape = 'u8[4096]{0}', space=vmem, size = 0x1000, scoped, tag = 'input window, operand 0, single buffered']
    #allocation3 [shape = 's32[1]{0}', space=sflag, size = 0x4, scoped, tag = 'scoped memory for tpu_custom_call.1']
    #allocation4 [shape = 'u8[8192]{0}', space=vmem, size = 0x2000, scoped, tag = 'input window, operand 1, single buffered']
    #allocation5 [shape = 's32[1]{0}', space=sflag, size = 0x4, scoped, tag = 'scoped memory for tpu_custom_call.1']
    #allocation6 [shape = 'u8[32768]{0}', space=vmem, size = 0x8000, scoped, tag = 'input window, operand 3, single buffered']
    #allocation7 [shape = 'u8[32768]{0}', space=vmem, size = 0x8000, scoped, tag = 'input window, operand 5, single buffered']
    #allocation8 [shape = 's32[1]{0}', space=sflag, size = 0x4, scoped, tag = 'scoped memory for tpu_custom_call.1']
    %12 = vsyncpa [#allocation3], 0
    %13 = vsyncpa [#allocation5], 0
    %14 = vsyncpa [#allocation8], 0
    // Predicated region
    $region2: #{tpu_custom_call.1} parent=1 // pred_check
      _
    $region3: #{tpu_custom_call.1} parent=1 // pred_check_branch
      %16 = sbr.rel (0) target = $region5
    $region4: #{tpu_custom_call.1} parent=1 // pred_region
      %s18 = ssub.s32 128, 128
      %19 = vsyncadd [#allocation3], %s18
      %s21 = sshll.u32 [#allocation2], 4
      %s22 = int_to_ptr.vmem [resolvable:$true] %s21
      %24 = dma.hbm_to_vmem [thread:$0]  %s0, 128, %s22, [#allocation3]
    $region5: #{tpu_custom_call.1} parent=1 // pred_fallthru
      _
    // Predicated region
    $region6: #{tpu_custom_call.1} parent=1 // pred_check
      _
    $region7: #{tpu_custom_call.1} parent=1 // pred_check_branch
      %26 = sbr.rel (0) target = $region9
    $region8: #{tpu_custom_call.1} parent=1 // pred_region
      %s28 = ssub.s32 256, 256
      %29 = vsyncadd [#allocation5], %s28
      %s30 = sshll.u32 [#allocation4], 4
      %s31 = int_to_ptr.vmem [resolvable:$true] %s30
      %36 = dma.hbm_to_vmem [thread:$0]  %s1, 256, %s31, [#allocation5], 64, 64, 4
    $region9: #{tpu_custom_call.1} parent=1 // pred_fallthru
      _
    // Predicated region
    $region10: #{tpu_custom_call.1} parent=1 // pred_check
      _
    $region11: #{tpu_custom_call.1} parent=1 // pred_check_branch
      %38 = sbr.rel (0) target = $region13
    $region12: #{tpu_custom_call.1} parent=1 // pred_region
      _
    $region13: #{tpu_custom_call.1} parent=1 // pred_fallthru
      _
    // Predicated region
    $region14: #{tpu_custom_call.1} parent=1 // pred_check
      _
    $region15: #{tpu_custom_call.1} parent=1 // pred_check_branch
      %40 = sbr.rel (0) target = $region17
    $region16: #{tpu_custom_call.1} parent=1 // pred_region
      %s42 = ssub.s32 1024, 1024
      %43 = vsyncadd [#allocation5], %s42
      %s44 = sshll.u32 [#allocation6], 4
      %s45 = int_to_ptr.vmem [resolvable:$true] %s44
      %50 = dma.hbm_to_vmem [thread:$0]  %s3, 1024, %s45, [#allocation5], 64, 64, 4
    $region17: #{tpu_custom_call.1} parent=1 // pred_fallthru
      _
    // Predicated region
    $region18: #{tpu_custom_call.1} parent=1 // pred_check
      _
    $region19: #{tpu_custom_call.1} parent=1 // pred_check_branch
      %52 = sbr.rel (0) target = $region21
    $region20: #{tpu_custom_call.1} parent=1 // pred_region
      _
    $region21: #{tpu_custom_call.1} parent=1 // pred_fallthru
      _
    // Predicated region
    $region22: #{tpu_custom_call.1} parent=1 // pred_check
      _
    $region23: #{tpu_custom_call.1} parent=1 // pred_check_branch
      %54 = sbr.rel (0) target = $region25
    $region24: #{tpu_custom_call.1} parent=1 // pred_region
      %s56 = ssub.s32 1024, 1024
      %57 = vsyncadd [#allocation8], %s56
      %s58 = sshll.u32 [#allocation7], 4
      %s59 = int_to_ptr.vmem [resolvable:$true] %s58
      %64 = dma.hbm_to_vmem [thread:$0]  %s5, 1024, %s59, [#allocation8], 64, 64, 4
    $region25: #{tpu_custom_call.1} parent=1 // pred_fallthru
      _
    // Predicated region
    $region26: #{tpu_custom_call.1} parent=1 // pred_check
      _
    $region27: #{tpu_custom_call.1} parent=1 // pred_check_branch
      %66 = sbr.rel (0) target = $region29
    $region28: #{tpu_custom_call.1} parent=1 // pred_region
      _
    $region29: #{tpu_custom_call.1} parent=1 // pred_fallthru
      _
    // Predicated region
    $region30: #{tpu_custom_call.1} parent=1 // pred_check
      _
    $region31: #{tpu_custom_call.1} parent=1 // pred_check_branch
      %68 = sbr.rel (0) target = $region33
    $region32: #{tpu_custom_call.1} parent=1 // pred_region
      %69 = dma.done [#allocation3], 128
    $region33: #{tpu_custom_call.1} parent=1 // pred_fallthru
      _
    // Predicated region
    $region34: #{tpu_custom_call.1} parent=1 // pred_check
      _
    $region35: #{tpu_custom_call.1} parent=1 // pred_check_branch
      %71 = sbr.rel (0) target = $region37
    $region36: #{tpu_custom_call.1} parent=1 // pred_region
      %72 = dma.done [#allocation5], 256
    $region37: #{tpu_custom_call.1} parent=1 // pred_fallthru
      _
    // Predicated region
    $region38: #{tpu_custom_call.1} parent=1 // pred_check
      _
    $region39: #{tpu_custom_call.1} parent=1 // pred_check_branch
      %74 = sbr.rel (0) target = $region41
    $region40: #{tpu_custom_call.1} parent=1 // pred_region
      %75 = dma.done [#allocation5], 1024
    $region41: #{tpu_custom_call.1} parent=1 // pred_fallthru
      _
    // Predicated region
    $region42: #{tpu_custom_call.1} parent=1 // pred_check
      _
    $region43: #{tpu_custom_call.1} parent=1 // pred_check_branch
      %77 = sbr.rel (0) target = $region45
    $region44: #{tpu_custom_call.1} parent=1 // pred_region
      %78 = dma.done [#allocation8], 1024
    $region45: #{tpu_custom_call.1} parent=1 // pred_fallthru
      _
    %v80 = vld [vmem:[#allocation4] sm:$0xf]
    %v81 = vld [vmem:[#allocation4 + $0x4] sm:$0xf]
    %v82 = vld [vmem:[#allocation4 + $0x8] sm:$0xf]
    %v83 = vld [vmem:[#allocation4 + $0xc] sm:$0xf]
    %v84 = vld [vmem:[%s2] sm:$0x1]
    %v85 = vld [vmem:[#allocation6] sm:$0xf]
    %v86 = vld [vmem:[#allocation6 + $0x4] sm:$0xf]
    %v87 = vld [vmem:[#allocation6 + $0x8] sm:$0xf]
    %v88 = vld [vmem:[#allocation6 + $0xc] sm:$0xf]
    %v89 = vld [vmem:[#allocation6 + $0x10] sm:$0xf]
    %v90 = vld [vmem:[#allocation6 + $0x14] sm:$0xf]
    %v91 = vld [vmem:[#allocation6 + $0x18] sm:$0xf]
    %v92 = vld [vmem:[#allocation6 + $0x1c] sm:$0xf]
    %v93 = vld [vmem:[#allocation6 + $0x20] sm:$0xf]
    %v94 = vld [vmem:[#allocation6 + $0x24] sm:$0xf]
    %v95 = vld [vmem:[#allocation6 + $0x28] sm:$0xf]
    %v96 = vld [vmem:[#allocation6 + $0x2c] sm:$0xf]
    %v97 = vld [vmem:[#allocation6 + $0x30] sm:$0xf]
    %v98 = vld [vmem:[#allocation6 + $0x34] sm:$0xf]
    %v99 = vld [vmem:[#allocation6 + $0x38] sm:$0xf]
    %v100 = vld [vmem:[#allocation6 + $0x3c] sm:$0xf]
    %v101 = vld [vmem:[%s4] sm:$0x1]
    %v102 = vld [vmem:[#allocation7] sm:$0xf]
    %v103 = vld [vmem:[#allocation7 + $0x4] sm:$0xf]
    %v104 = vld [vmem:[#allocation7 + $0x8] sm:$0xf]
    %v105 = vld [vmem:[#allocation7 + $0xc] sm:$0xf]
    %v106 = vld [vmem:[#allocation7 + $0x10] sm:$0xf]
    %v107 = vld [vmem:[#allocation7 + $0x14] sm:$0xf]
    %v108 = vld [vmem:[#allocation7 + $0x18] sm:$0xf]
    %v109 = vld [vmem:[#allocation7 + $0x1c] sm:$0xf]
    %v110 = vld [vmem:[#allocation7 + $0x20] sm:$0xf]
    %v111 = vld [vmem:[#allocation7 + $0x24] sm:$0xf]
    %v112 = vld [vmem:[#allocation7 + $0x28] sm:$0xf]
    %v113 = vld [vmem:[#allocation7 + $0x2c] sm:$0xf]
    %v114 = vld [vmem:[#allocation7 + $0x30] sm:$0xf]
    %v115 = vld [vmem:[#allocation7 + $0x34] sm:$0xf]
    %v116 = vld [vmem:[#allocation7 + $0x38] sm:$0xf]
    %v117 = vld [vmem:[#allocation7 + $0x3c] sm:$0xf]
    %v118 = vld [vmem:[%s6] sm:$0x1]
    %v119 = vld [vmem:[#allocation2] sm:$0xff]
    %v120 = vpack.c.bf16 %v119, %v119
    %v122 = vlaneseq
    %v123 = vshrl.u32 %v122, 7
    %v124 = vsub.s32 0, %v123
    %v125 = vrot.slane %v84, %v124
    %v131 = vunpack.c.l.b16 %v80
    %v132 = vunpack.c.l.b16 %v81
    %v133 = vunpack.c.l.b16 %v82
    %v134 = vunpack.c.l.b16 %v83
    %v135 = vpack.c.b16 %v132, %v131
    %v136 = vpack.c.b16 %v134, %v133
    %vm139 = vcmask 261120
    %v141 = vsel %vm139, %v120, 0
    %143 = vmatprep.subr.bf16.mxu0 0
    %144 = vmatpush1.bf16.msra.mxu0 %v135
    %145 = vmatprep.subr.bf16.mxu0 0
    %146 = vmatpush1.bf16.msra.mxu0 %v136
    %147 = vmatprep.subr.bf16.mxu0 0
    %148 = vmatpush1.bf16.msra.mxu0 0
    %149 = vmatprep.subr.bf16.mxu0 0
    %150 = vmatpush1.bf16.msra.mxu0 0
    %151 = vmatprep.subr.bf16.mxu0 0
    %152 = vmatpush1.bf16.msra.mxu0 0
    %153 = vmatprep.subr.bf16.mxu0 0
    %154 = vmatpush1.bf16.msra.mxu0 0
    %155 = vmatprep.subr.bf16.mxu0 0
    %156 = vmatpush1.bf16.msra.mxu0 0
    %157 = vmatprep.subr.bf16.mxu0 0
    %158 = vmatpush1.bf16.msra.mxu0 0
    %159 = vmatprep.subr.bf16.mxu0 0
    %160 = vmatpush1.bf16.msra.mxu0 0
    %161 = vmatprep.subr.bf16.mxu0 0
    %162 = vmatpush1.bf16.msra.mxu0 0
    %163 = vmatprep.subr.bf16.mxu0 0
    %164 = vmatpush1.bf16.msra.mxu0 0
    %165 = vmatprep.subr.bf16.mxu0 0
    %166 = vmatpush1.bf16.msra.mxu0 0
    %167 = vmatprep.subr.bf16.mxu0 0
    %168 = vmatpush1.bf16.msra.mxu0 0
    %169 = vmatprep.subr.bf16.mxu0 0
    %170 = vmatpush1.bf16.msra.mxu0 0
    %171 = vmatprep.subr.bf16.mxu0 0
    %172 = vmatpush1.bf16.msra.mxu0 0
    %173 = vmatprep.subr.bf16.mxu0 0
    %174 = vmatpush1.bf16.msra.mxu0 0
    %175 = vmatprep.mubr.bf16.mxu0 0
    %176 = vmatmul.mubr.bf16.gmra.mrb[0].mxu0 %v141
    %v177 = vpop.f32.mrb[0].mxu0
    %v178 = vadd.f32 %v125, %v177
    %v179 = vpop.f32.mrb[0].mxu0
    %v180 = vpop.f32.mrb[0].mxu0
    %v181 = vpop.f32.mrb[0].mxu0
    %182 = vdwg.mxu0
    %v183 = vmax.f32 %v178, 0.0
    %v184 = vpack.c.bf16 %v183, %v183
    %v186 = vlaneseq
    %v187 = vshrl.u32 %v186, 7
    %v188 = vsub.s32 0, %v187
    %v189 = vrot.slane %v101, %v188
    %v207 = vunpack.c.l.b16 %v85
    %v208 = vunpack.c.l.b16 %v86
    %v209 = vunpack.c.l.b16 %v87
    %v210 = vunpack.c.l.b16 %v88
    %v211 = vunpack.c.l.b16 %v89
    %v212 = vunpack.c.l.b16 %v90
    %v213 = vunpack.c.l.b16 %v91
    %v214 = vunpack.c.l.b16 %v92
    %v215 = vunpack.c.l.b16 %v93
    %v216 = vunpack.c.l.b16 %v94
    %v217 = vunpack.c.l.b16 %v95
    %v218 = vunpack.c.l.b16 %v96
    %v219 = vunpack.c.l.b16 %v97
    %v220 = vunpack.c.l.b16 %v98
    %v221 = vunpack.c.l.b16 %v99
    %v222 = vunpack.c.l.b16 %v100
    %v223 = vpack.c.b16 %v208, %v207
    %v224 = vpack.c.b16 %v210, %v209
    %v225 = vpack.c.b16 %v212, %v211
    %v226 = vpack.c.b16 %v214, %v213
    %v227 = vpack.c.b16 %v216, %v215
    %v228 = vpack.c.b16 %v218, %v217
    %v229 = vpack.c.b16 %v220, %v219
    %v230 = vpack.c.b16 %v222, %v221
    %239 = vmatprep.subr.bf16.mxu0 0
    %240 = vmatpush1.bf16.msra.mxu0 %v223
    %241 = vmatprep.subr.bf16.mxu0 0
    %242 = vmatpush1.bf16.msra.mxu0 %v224
    %243 = vmatprep.subr.bf16.mxu0 0
    %244 = vmatpush1.bf16.msra.mxu0 %v225
    %245 = vmatprep.subr.bf16.mxu0 0
    %246 = vmatpush1.bf16.msra.mxu0 %v226
    %247 = vmatprep.subr.bf16.mxu0 0
    %248 = vmatpush1.bf16.msra.mxu0 %v227
    %249 = vmatprep.subr.bf16.mxu0 0
    %250 = vmatpush1.bf16.msra.mxu0 %v228
    %251 = vmatprep.subr.bf16.mxu0 0
    %252 = vmatpush1.bf16.msra.mxu0 %v229
    %253 = vmatprep.subr.bf16.mxu0 0
    %254 = vmatpush1.bf16.msra.mxu0 %v230
    %255 = vmatprep.subr.bf16.mxu0 0
    %256 = vmatpush1.bf16.msra.mxu0 0
    %257 = vmatprep.subr.bf16.mxu0 0
    %258 = vmatpush1.bf16.msra.mxu0 0
    %259 = vmatprep.subr.bf16.mxu0 0
    %260 = vmatpush1.bf16.msra.mxu0 0
    %261 = vmatprep.subr.bf16.mxu0 0
    %262 = vmatpush1.bf16.msra.mxu0 0
    %263 = vmatprep.subr.bf16.mxu0 0
    %264 = vmatpush1.bf16.msra.mxu0 0
    %265 = vmatprep.subr.bf16.mxu0 0
    %266 = vmatpush1.bf16.msra.mxu0 0
    %267 = vmatprep.subr.bf16.mxu0 0
    %268 = vmatpush1.bf16.msra.mxu0 0
    %269 = vmatprep.subr.bf16.mxu0 0
    %270 = vmatpush1.bf16.msra.mxu0 0
    %271 = vmatprep.mubr.bf16.mxu0 0
    %272 = vmatmul.mubr.bf16.gmra.mrb[0].mxu0 %v184
    %v273 = vpop.f32.mrb[0].mxu0
    %v274 = vadd.f32 %v189, %v273
    %v275 = vpop.f32.mrb[0].mxu0
    %v276 = vpop.f32.mrb[0].mxu0
    %v277 = vpop.f32.mrb[0].mxu0
    %278 = vdwg.mxu0
    %v279 = vmax.f32 %v274, 0.0
    %v280 = vpack.c.bf16 %v279, %v279
    %v282 = vlaneseq
    %v283 = vshrl.u32 %v282, 7
    %v284 = vsub.s32 0, %v283
    %v285 = vrot.slane %v118, %v284
    %v303 = vunpack.c.l.b16 %v102
    %v304 = vunpack.c.l.b16 %v103
    %v305 = vunpack.c.l.b16 %v104
    %v306 = vunpack.c.l.b16 %v105
    %v307 = vunpack.c.l.b16 %v106
    %v308 = vunpack.c.l.b16 %v107
    %v309 = vunpack.c.l.b16 %v108
    %v310 = vunpack.c.l.b16 %v109
    %v311 = vunpack.c.l.b16 %v110
    %v312 = vunpack.c.l.b16 %v111
    %v313 = vunpack.c.l.b16 %v112
    %v314 = vunpack.c.l.b16 %v113
    %v315 = vunpack.c.l.b16 %v114
    %v316 = vunpack.c.l.b16 %v115
    %v317 = vunpack.c.l.b16 %v116
    %v318 = vunpack.c.l.b16 %v117
    %v319 = vpack.c.b16 %v304, %v303
    %v320 = vpack.c.b16 %v306, %v305
    %v321 = vpack.c.b16 %v308, %v307
    %v322 = vpack.c.b16 %v310, %v309
    %v323 = vpack.c.b16 %v312, %v311
    %v324 = vpack.c.b16 %v314, %v313
    %v325 = vpack.c.b16 %v316, %v315
    %v326 = vpack.c.b16 %v318, %v317
    %335 = vmatprep.subr.bf16.mxu0 0
    %336 = vmatpush1.bf16.msra.mxu0 %v319
    %337 = vmatprep.subr.bf16.mxu0 0
    %338 = vmatpush1.bf16.msra.mxu0 %v320
    %339 = vmatprep.subr.bf16.mxu0 0
    %340 = vmatpush1.bf16.msra.mxu0 %v321
    %341 = vmatprep.subr.bf16.mxu0 0
    %342 = vmatpush1.bf16.msra.mxu0 %v322
    %343 = vmatprep.subr.bf16.mxu0 0
    %344 = vmatpush1.bf16.msra.mxu0 %v323
    %345 = vmatprep.subr.bf16.mxu0 0
    %346 = vmatpush1.bf16.msra.mxu0 %v324
    %347 = vmatprep.subr.bf16.mxu0 0
    %348 = vmatpush1.bf16.msra.mxu0 %v325
    %349 = vmatprep.subr.bf16.mxu0 0
    %350 = vmatpush1.bf16.msra.mxu0 %v326
    %351 = vmatprep.subr.bf16.mxu0 0
    %352 = vmatpush1.bf16.msra.mxu0 0
    %353 = vmatprep.subr.bf16.mxu0 0
    %354 = vmatpush1.bf16.msra.mxu0 0
    %355 = vmatprep.subr.bf16.mxu0 0
    %356 = vmatpush1.bf16.msra.mxu0 0
    %357 = vmatprep.subr.bf16.mxu0 0
    %358 = vmatpush1.bf16.msra.mxu0 0
    %359 = vmatprep.subr.bf16.mxu0 0
    %360 = vmatpush1.bf16.msra.mxu0 0
    %361 = vmatprep.subr.bf16.mxu0 0
    %362 = vmatpush1.bf16.msra.mxu0 0
    %363 = vmatprep.subr.bf16.mxu0 0
    %364 = vmatpush1.bf16.msra.mxu0 0
    %365 = vmatprep.subr.bf16.mxu0 0
    %366 = vmatpush1.bf16.msra.mxu0 0
    %367 = vmatprep.mubr.bf16.mxu0 0
    %368 = vmatmul.mubr.bf16.gmra.mrb[0].mxu0 %v280
    %v369 = vpop.f32.mrb[0].mxu0
    %v370 = vadd.f32 %v285, %v369
    %v371 = vpop.f32.mrb[0].mxu0
    %v372 = vpop.f32.mrb[0].mxu0
    %v373 = vpop.f32.mrb[0].mxu0
    %374 = vdwg.mxu0
    %vm375 = vcmask 31744
    %376 = vst.msk [vmem:[%s7] sm:$0xff] %vm375, %v370
    // Predicated region
    $region46: #{tpu_custom_call.1} parent=1 // pred_check
      _
    $region47: #{tpu_custom_call.1} parent=1 // pred_check_branch
      %378 = sbr.rel (0) target = $region49
    $region48: #{tpu_custom_call.1} parent=1 // pred_region
      _
    $region49: #{tpu_custom_call.1} parent=1 // pred_fallthru
      _
    // Predicated region
    $region50: #{tpu_custom_call.1} parent=1 // pred_check
      _
    $region51: #{tpu_custom_call.1} parent=1 // pred_check_branch
      %380 = sbr.rel (0) target = $region53
    $region52: #{tpu_custom_call.1} parent=1 // pred_region
      _
    $region53: #{tpu_custom_call.1} parent=1 // pred_fallthru
      _
    %381 = vsyncpa [#allocation3], 1
    %382 = vsyncpa [#allocation5], 1
    %383 = vsyncpa [#allocation8], 1

</llo_original>
